<compile_context>
chip_gen: v5e
topology: v5e:2x2
jax: 0.10.0
libtpu: 0.0.40
codegen_flags: <defaults>
</compile_context>

<pallas_src>
import jax
import jax.numpy as jnp
from jax.experimental import pallas as pl
from jax.experimental.pallas import tpu as pltpu


def _mlp_kernel(p_ref, x_ref, o_ref):
    # p_ref : SMEM (27,) f32   packed [W1(4),b1(2), W2(4),b2(2), ..., W5(2),b5(1)]
    # x_ref : VMEM (2, tb//128, 128) f32   feature-major, sublane+lane dense
    # o_ref : VMEM (17, tb//128, 128) f32  packed activations
    a0 = x_ref[0]                                  # (tb//128, 128)
    a1 = x_ref[1]

    row = 0
    for layer in range(4):                         # fc1..fc4 (+tanh)
        base = 6 * layer
        # PyTorch row-major W[out, in]: z = x @ W.T + b  -> broadcast FMA.
        z0 = p_ref[base + 0] * a0 + p_ref[base + 1] * a1 + p_ref[base + 4]
        z1 = p_ref[base + 2] * a0 + p_ref[base + 3] * a1 + p_ref[base + 5]
        o_ref[row + 0] = z0
        o_ref[row + 1] = z1
        a0 = jnp.tanh(z0)                          # EUP slot; free vs stores
        a1 = jnp.tanh(z1)
        o_ref[row + 2] = a0
        o_ref[row + 3] = a1
        row += 4

    # fc5: 2 -> 1
    o_ref[16] = p_ref[24] * a0 + p_ref[25] * a1 + p_ref[26]


def init_params(key):
    """PyTorch-default-style init: U(-1/sqrt(fan_in), 1/sqrt(fan_in)).
    Returns [(W, b)] with W of shape (out, in), b of shape (out,)."""
    dims = [(2, 2), (2, 2), (2, 2), (2, 2), (2, 1)]  # (in, out)
    params = []
    for fin, fout in dims:
        key, kw, kb = jax.random.split(key, 3)
        bound = 1.0 / (fin ** 0.5)
        w = jax.random.uniform(kw, (fout, fin), jnp.float32, -bound, bound)
        b = jax.random.uniform(kb, (fout,), jnp.float32, -bound, bound)
        params.append((w, b))
    return params


def pack_params(params):
    """Flatten the 5 (W, b) pairs into one (27,) f32 vector for SMEM prefetch."""
    flat = []
    for w, b in params:
        flat.append(w.reshape(-1))
        flat.append(b.reshape(-1))
    return jnp.concatenate(flat).astype(jnp.float32)


def _default_tile_batch(n_pad):
    """n_pad is a multiple of 128 (lane axis).  Multi-step tiles must keep the
    sublane axis dense: tb // 128 must be a multiple of 8 (tb % 1024 == 0).
    Large tiles amortize the ~0.35us per-grid-step overhead; 8K-32K rows keep
    the double-buffered (2+17)*tb*4 B footprint well under VMEM limits on all
    generations (<=5 MB at tb=32768)."""
    for tb in (32768, 16384, 8192):
        if n_pad % tb == 0 and n_pad > tb:
            return tb
    return n_pad  # single full-size tile: optimal on single-TC chips for small N


def spirals_classifier_2d_forward(params, x, *, tile_batch=None):
    """Returns the same list of 10 tensors as the PyTorch forward:
       [input, fc1, tanh, fc2, tanh, fc3, tanh, fc4, tanh, fc5]."""
    n = x.shape[0]
    n_pad = ((n + 127) // 128) * 128
    tb = _default_tile_batch(n_pad) if tile_batch is None else tile_batch
    assert n_pad % tb == 0, f"tile_batch={tb} must divide padded batch={n_pad}"
    assert tb == n_pad or tb % 1024 == 0, (
        f"tile_batch={tb} must be a multiple of 1024 (8 sublanes x 128 lanes) "
        f"or equal the padded batch={n_pad}")

    packed = pack_params(params)                 # (27,) f32 -> SMEM prefetch

    # Feature-major, lane/sublane-dense relayout (wrapper-side plumbing).
    x_t = x.astype(jnp.float32).T                # (2, n)
    if n_pad != n:
        x_t = jnp.pad(x_t, ((0, 0), (0, n_pad - n)))
    x_t = x_t.reshape(2, n_pad // 128, 128)

    sub = tb // 128
    grid = (n_pad // tb,)
    packed_out = pl.pallas_call(
        _mlp_kernel,
        out_shape=jax.ShapeDtypeStruct((17, n_pad // 128, 128), jnp.float32),
        grid_spec=pltpu.PrefetchScalarGridSpec(
            num_scalar_prefetch=1,
            grid=grid,
            in_specs=[pl.BlockSpec((2, sub, 128), lambda i, p: (0, i, 0))],
            out_specs=pl.BlockSpec((17, sub, 128), lambda i, p: (0, i, 0)),
        ),
        compiler_params=pltpu.CompilerParams(
            dimension_semantics=("parallel",)),
    )(packed, x_t)

    # Collapsed epilogue: one transpose of the whole slab, then static slices.
    slab = packed_out.reshape(17, n_pad)[:, :n].T            # (n, 17)
    cols = [(0, 2), (2, 4), (4, 6), (6, 8), (8, 10),
            (10, 12), (12, 14), (14, 16), (16, 17)]
    outs = [slab[:, a:b] for a, b in cols]
    return [x] + outs


def _reference_forward(params, x):
    outputs = [x]
    h = x
    for li, (w, b) in enumerate(params):
        h = h @ w.T + b
        outputs.append(h)
        if li < len(params) - 1:
            h = jnp.tanh(h)
            outputs.append(h)
    return outputs


if __name__ == "__main__":
    key = jax.random.PRNGKey(0)
    key, kx = jax.random.split(key)
    n = 1024
    x = jax.random.normal(kx, (n, 2), dtype=jnp.float32)

    params = init_params(jax.random.PRNGKey(0))

    outs = spirals_classifier_2d_forward(params, x)
    outs = [jax.block_until_ready(o) for o in outs]

    refs = _reference_forward(params, x)
    assert len(outs) == 10
    for got, want in zip(outs, refs):
        assert got.shape == want.shape, (got.shape, want.shape)
        assert jnp.allclose(got, want, atol=1e-5, rtol=1e-5)

    print("KERNEL_OK")
</pallas_src>

<mosaic_0001>
module attributes {stable_mosaic.version = 11 : i64} {
  func.func @_mlp_kernel(%arg0: i32, %arg1: memref<27xf32, #tpu.memory_space<smem>>, %arg2: memref<2x8x128xf32, #tpu.memory_space<vmem>>, %arg3: memref<17x8x128xf32, #tpu.memory_space<vmem>>) attributes {dimension_semantics = [#tpu.dimension_semantics<parallel>], iteration_bounds = array<i64: 1>, scalar_prefetch = 1 : i64, scratch_operands = 0 : i64, tpu.core_type = #tpu.core_type<tc>, window_params = [{transform_indices = @transform_0, window_bounds = array<i64: 2, 8, 128>}, {transform_indices = @transform_1, window_bounds = array<i64: 17, 8, 128>}]} {
    %c0 = arith.constant 0 : index
    %c0_0 = arith.constant 0 : index
    %c0_1 = arith.constant 0 : index
    %0 = vector.load %arg2[%c0, %c0_0, %c0_1] : memref<2x8x128xf32, #tpu.memory_space<vmem>>, vector<1x8x128xf32>
    %1 = vector.shape_cast %0 : vector<1x8x128xf32> to vector<8x128xf32>
    %c1 = arith.constant 1 : index
    %c0_2 = arith.constant 0 : index
    %c0_3 = arith.constant 0 : index
    %2 = vector.load %arg2[%c1, %c0_2, %c0_3] : memref<2x8x128xf32, #tpu.memory_space<vmem>>, vector<1x8x128xf32>
    %3 = vector.shape_cast %2 : vector<1x8x128xf32> to vector<8x128xf32>
    %c0_4 = arith.constant 0 : index
    %4 = memref.load %arg1[%c0_4] : memref<27xf32, #tpu.memory_space<smem>>
    %5 = vector.broadcast %4 : f32 to vector<8x128xf32>
    %6 = arith.mulf %5, %1 : vector<8x128xf32>
    %c1_5 = arith.constant 1 : index
    %7 = memref.load %arg1[%c1_5] : memref<27xf32, #tpu.memory_space<smem>>
    %8 = vector.broadcast %7 : f32 to vector<8x128xf32>
    %9 = arith.mulf %8, %3 : vector<8x128xf32>
    %10 = arith.addf %6, %9 : vector<8x128xf32>
    %c4 = arith.constant 4 : index
    %11 = memref.load %arg1[%c4] : memref<27xf32, #tpu.memory_space<smem>>
    %12 = vector.broadcast %11 : f32 to vector<8x128xf32>
    %13 = arith.addf %10, %12 : vector<8x128xf32>
    %c2 = arith.constant 2 : index
    %14 = memref.load %arg1[%c2] : memref<27xf32, #tpu.memory_space<smem>>
    %15 = vector.broadcast %14 : f32 to vector<8x128xf32>
    %16 = arith.mulf %15, %1 : vector<8x128xf32>
    %c3 = arith.constant 3 : index
    %17 = memref.load %arg1[%c3] : memref<27xf32, #tpu.memory_space<smem>>
    %18 = vector.broadcast %17 : f32 to vector<8x128xf32>
    %19 = arith.mulf %18, %3 : vector<8x128xf32>
    %20 = arith.addf %16, %19 : vector<8x128xf32>
    %c5 = arith.constant 5 : index
    %21 = memref.load %arg1[%c5] : memref<27xf32, #tpu.memory_space<smem>>
    %22 = vector.broadcast %21 : f32 to vector<8x128xf32>
    %23 = arith.addf %20, %22 : vector<8x128xf32>
    %c0_6 = arith.constant 0 : index
    %c0_7 = arith.constant 0 : index
    %c0_8 = arith.constant 0 : index
    %24 = vector.load %arg3[%c0_6, %c0_7, %c0_8] : memref<17x8x128xf32, #tpu.memory_space<vmem>>, vector<1x8x128xf32>
    %25 = vector.shape_cast %24 : vector<1x8x128xf32> to vector<8x128xf32>
    %26 = vector.shape_cast %13 : vector<8x128xf32> to vector<1x8x128xf32>
    tpu.vector_store %arg3[%c0_6, %c0_7, %c0_8], %26 {strides = array<i32>} : memref<17x8x128xf32, #tpu.memory_space<vmem>>, vector<1x8x128xf32>,
    %c1_9 = arith.constant 1 : index
    %c0_10 = arith.constant 0 : index
    %c0_11 = arith.constant 0 : index
    %27 = vector.load %arg3[%c1_9, %c0_10, %c0_11] : memref<17x8x128xf32, #tpu.memory_space<vmem>>, vector<1x8x128xf32>
    %28 = vector.shape_cast %27 : vector<1x8x128xf32> to vector<8x128xf32>
    %29 = vector.shape_cast %23 : vector<8x128xf32> to vector<1x8x128xf32>
    tpu.vector_store %arg3[%c1_9, %c0_10, %c0_11], %29 {strides = array<i32>} : memref<17x8x128xf32, #tpu.memory_space<vmem>>, vector<1x8x128xf32>,
    %30 = math.tanh %13 : vector<8x128xf32>
    %31 = math.tanh %23 : vector<8x128xf32>
    %c2_12 = arith.constant 2 : index
    %c0_13 = arith.constant 0 : index
    %c0_14 = arith.constant 0 : index
    %32 = vector.load %arg3[%c2_12, %c0_13, %c0_14] : memref<17x8x128xf32, #tpu.memory_space<vmem>>, vector<1x8x128xf32>
    %33 = vector.shape_cast %32 : vector<1x8x128xf32> to vector<8x128xf32>
    %34 = vector.shape_cast %30 : vector<8x128xf32> to vector<1x8x128xf32>
    tpu.vector_store %arg3[%c2_12, %c0_13, %c0_14], %34 {strides = array<i32>} : memref<17x8x128xf32, #tpu.memory_space<vmem>>, vector<1x8x128xf32>,
    %c3_15 = arith.constant 3 : index
    %c0_16 = arith.constant 0 : index
    %c0_17 = arith.constant 0 : index
    %35 = vector.load %arg3[%c3_15, %c0_16, %c0_17] : memref<17x8x128xf32, #tpu.memory_space<vmem>>, vector<1x8x128xf32>
    %36 = vector.shape_cast %35 : vector<1x8x128xf32> to vector<8x128xf32>
    %37 = vector.shape_cast %31 : vector<8x128xf32> to vector<1x8x128xf32>
    tpu.vector_store %arg3[%c3_15, %c0_16, %c0_17], %37 {strides = array<i32>} : memref<17x8x128xf32, #tpu.memory_space<vmem>>, vector<1x8x128xf32>,
    %c6 = arith.constant 6 : index
    %38 = memref.load %arg1[%c6] : memref<27xf32, #tpu.memory_space<smem>>
    %39 = vector.broadcast %38 : f32 to vector<8x128xf32>
    %40 = arith.mulf %39, %30 : vector<8x128xf32>
    %c7 = arith.constant 7 : index
    %41 = memref.load %arg1[%c7] : memref<27xf32, #tpu.memory_space<smem>>
    %42 = vector.broadcast %41 : f32 to vector<8x128xf32>
    %43 = arith.mulf %42, %31 : vector<8x128xf32>
    %44 = arith.addf %40, %43 : vector<8x128xf32>
    %c10 = arith.constant 10 : index
    %45 = memref.load %arg1[%c10] : memref<27xf32, #tpu.memory_space<smem>>
    %46 = vector.broadcast %45 : f32 to vector<8x128xf32>
    %47 = arith.addf %44, %46 : vector<8x128xf32>
    %c8 = arith.constant 8 : index
    %48 = memref.load %arg1[%c8] : memref<27xf32, #tpu.memory_space<smem>>
    %49 = vector.broadcast %48 : f32 to vector<8x128xf32>
    %50 = arith.mulf %49, %30 : vector<8x128xf32>
    %c9 = arith.constant 9 : index
    %51 = memref.load %arg1[%c9] : memref<27xf32, #tpu.memory_space<smem>>
    %52 = vector.broadcast %51 : f32 to vector<8x128xf32>
    %53 = arith.mulf %52, %31 : vector<8x128xf32>
    %54 = arith.addf %50, %53 : vector<8x128xf32>
    %c11 = arith.constant 11 : index
    %55 = memref.load %arg1[%c11] : memref<27xf32, #tpu.memory_space<smem>>
    %56 = vector.broadcast %55 : f32 to vector<8x128xf32>
    %57 = arith.addf %54, %56 : vector<8x128xf32>
    %c4_18 = arith.constant 4 : index
    %c0_19 = arith.constant 0 : index
    %c0_20 = arith.constant 0 : index
    %58 = vector.load %arg3[%c4_18, %c0_19, %c0_20] : memref<17x8x128xf32, #tpu.memory_space<vmem>>, vector<1x8x128xf32>
    %59 = vector.shape_cast %58 : vector<1x8x128xf32> to vector<8x128xf32>
    %60 = vector.shape_cast %47 : vector<8x128xf32> to vector<1x8x128xf32>
    tpu.vector_store %arg3[%c4_18, %c0_19, %c0_20], %60 {strides = array<i32>} : memref<17x8x128xf32, #tpu.memory_space<vmem>>, vector<1x8x128xf32>,
    %c5_21 = arith.constant 5 : index
    %c0_22 = arith.constant 0 : index
    %c0_23 = arith.constant 0 : index
    %61 = vector.load %arg3[%c5_21, %c0_22, %c0_23] : memref<17x8x128xf32, #tpu.memory_space<vmem>>, vector<1x8x128xf32>
    %62 = vector.shape_cast %61 : vector<1x8x128xf32> to vector<8x128xf32>
    %63 = vector.shape_cast %57 : vector<8x128xf32> to vector<1x8x128xf32>
    tpu.vector_store %arg3[%c5_21, %c0_22, %c0_23], %63 {strides = array<i32>} : memref<17x8x128xf32, #tpu.memory_space<vmem>>, vector<1x8x128xf32>,
    %64 = math.tanh %47 : vector<8x128xf32>
    %65 = math.tanh %57 : vector<8x128xf32>
    %c6_24 = arith.constant 6 : index
    %c0_25 = arith.constant 0 : index
    %c0_26 = arith.constant 0 : index
    %66 = vector.load %arg3[%c6_24, %c0_25, %c0_26] : memref<17x8x128xf32, #tpu.memory_space<vmem>>, vector<1x8x128xf32>
    %67 = vector.shape_cast %66 : vector<1x8x128xf32> to vector<8x128xf32>
    %68 = vector.shape_cast %64 : vector<8x128xf32> to vector<1x8x128xf32>
    tpu.vector_store %arg3[%c6_24, %c0_25, %c0_26], %68 {strides = array<i32>} : memref<17x8x128xf32, #tpu.memory_space<vmem>>, vector<1x8x128xf32>,
    %c7_27 = arith.constant 7 : index
    %c0_28 = arith.constant 0 : index
    %c0_29 = arith.constant 0 : index
    %69 = vector.load %arg3[%c7_27, %c0_28, %c0_29] : memref<17x8x128xf32, #tpu.memory_space<vmem>>, vector<1x8x128xf32>
    %70 = vector.shape_cast %69 : vector<1x8x128xf32> to vector<8x128xf32>
    %71 = vector.shape_cast %65 : vector<8x128xf32> to vector<1x8x128xf32>
    tpu.vector_store %arg3[%c7_27, %c0_28, %c0_29], %71 {strides = array<i32>} : memref<17x8x128xf32, #tpu.memory_space<vmem>>, vector<1x8x128xf32>,
    %c12 = arith.constant 12 : index
    %72 = memref.load %arg1[%c12] : memref<27xf32, #tpu.memory_space<smem>>
    %73 = vector.broadcast %72 : f32 to vector<8x128xf32>
    %74 = arith.mulf %73, %64 : vector<8x128xf32>
    %c13 = arith.constant 13 : index
    %75 = memref.load %arg1[%c13] : memref<27xf32, #tpu.memory_space<smem>>
    %76 = vector.broadcast %75 : f32 to vector<8x128xf32>
    %77 = arith.mulf %76, %65 : vector<8x128xf32>
    %78 = arith.addf %74, %77 : vector<8x128xf32>
    %c16 = arith.constant 16 : index
    %79 = memref.load %arg1[%c16] : memref<27xf32, #tpu.memory_space<smem>>
    %80 = vector.broadcast %79 : f32 to vector<8x128xf32>
    %81 = arith.addf %78, %80 : vector<8x128xf32>
    %c14 = arith.constant 14 : index
    %82 = memref.load %arg1[%c14] : memref<27xf32, #tpu.memory_space<smem>>
    %83 = vector.broadcast %82 : f32 to vector<8x128xf32>
    %84 = arith.mulf %83, %64 : vector<8x128xf32>
    %c15 = arith.constant 15 : index
    %85 = memref.load %arg1[%c15] : memref<27xf32, #tpu.memory_space<smem>>
    %86 = vector.broadcast %85 : f32 to vector<8x128xf32>
    %87 = arith.mulf %86, %65 : vector<8x128xf32>
    %88 = arith.addf %84, %87 : vector<8x128xf32>
    %c17 = arith.constant 17 : index
    %89 = memref.load %arg1[%c17] : memref<27xf32, #tpu.memory_space<smem>>
    %90 = vector.broadcast %89 : f32 to vector<8x128xf32>
    %91 = arith.addf %88, %90 : vector<8x128xf32>
    %c8_30 = arith.constant 8 : index
    %c0_31 = arith.constant 0 : index
    %c0_32 = arith.constant 0 : index
    %92 = vector.load %arg3[%c8_30, %c0_31, %c0_32] : memref<17x8x128xf32, #tpu.memory_space<vmem>>, vector<1x8x128xf32>
    %93 = vector.shape_cast %92 : vector<1x8x128xf32> to vector<8x128xf32>
    %94 = vector.shape_cast %81 : vector<8x128xf32> to vector<1x8x128xf32>
    tpu.vector_store %arg3[%c8_30, %c0_31, %c0_32], %94 {strides = array<i32>} : memref<17x8x128xf32, #tpu.memory_space<vmem>>, vector<1x8x128xf32>,
    %c9_33 = arith.constant 9 : index
    %c0_34 = arith.constant 0 : index
    %c0_35 = arith.constant 0 : index
    %95 = vector.load %arg3[%c9_33, %c0_34, %c0_35] : memref<17x8x128xf32, #tpu.memory_space<vmem>>, vector<1x8x128xf32>
    %96 = vector.shape_cast %95 : vector<1x8x128xf32> to vector<8x128xf32>
    %97 = vector.shape_cast %91 : vector<8x128xf32> to vector<1x8x128xf32>
    tpu.vector_store %arg3[%c9_33, %c0_34, %c0_35], %97 {strides = array<i32>} : memref<17x8x128xf32, #tpu.memory_space<vmem>>, vector<1x8x128xf32>,
    %98 = math.tanh %81 : vector<8x128xf32>
    %99 = math.tanh %91 : vector<8x128xf32>
    %c10_36 = arith.constant 10 : index
    %c0_37 = arith.constant 0 : index
    %c0_38 = arith.constant 0 : index
    %100 = vector.load %arg3[%c10_36, %c0_37, %c0_38] : memref<17x8x128xf32, #tpu.memory_space<vmem>>, vector<1x8x128xf32>
    %101 = vector.shape_cast %100 : vector<1x8x128xf32> to vector<8x128xf32>
    %102 = vector.shape_cast %98 : vector<8x128xf32> to vector<1x8x128xf32>
    tpu.vector_store %arg3[%c10_36, %c0_37, %c0_38], %102 {strides = array<i32>} : memref<17x8x128xf32, #tpu.memory_space<vmem>>, vector<1x8x128xf32>,
    %c11_39 = arith.constant 11 : index
    %c0_40 = arith.constant 0 : index
    %c0_41 = arith.constant 0 : index
    %103 = vector.load %arg3[%c11_39, %c0_40, %c0_41] : memref<17x8x128xf32, #tpu.memory_space<vmem>>, vector<1x8x128xf32>
    %104 = vector.shape_cast %103 : vector<1x8x128xf32> to vector<8x128xf32>
    %105 = vector.shape_cast %99 : vector<8x128xf32> to vector<1x8x128xf32>
    tpu.vector_store %arg3[%c11_39, %c0_40, %c0_41], %105 {strides = array<i32>} : memref<17x8x128xf32, #tpu.memory_space<vmem>>, vector<1x8x128xf32>,
    %c18 = arith.constant 18 : index
    %106 = memref.load %arg1[%c18] : memref<27xf32, #tpu.memory_space<smem>>
    %107 = vector.broadcast %106 : f32 to vector<8x128xf32>
    %108 = arith.mulf %107, %98 : vector<8x128xf32>
    %c19 = arith.constant 19 : index
    %109 = memref.load %arg1[%c19] : memref<27xf32, #tpu.memory_space<smem>>
    %110 = vector.broadcast %109 : f32 to vector<8x128xf32>
    %111 = arith.mulf %110, %99 : vector<8x128xf32>
    %112 = arith.addf %108, %111 : vector<8x128xf32>
    %c22 = arith.constant 22 : index
    %113 = memref.load %arg1[%c22] : memref<27xf32, #tpu.memory_space<smem>>
    %114 = vector.broadcast %113 : f32 to vector<8x128xf32>
    %115 = arith.addf %112, %114 : vector<8x128xf32>
    %c20 = arith.constant 20 : index
    %116 = memref.load %arg1[%c20] : memref<27xf32, #tpu.memory_space<smem>>
    %117 = vector.broadcast %116 : f32 to vector<8x128xf32>
    %118 = arith.mulf %117, %98 : vector<8x128xf32>
    %c21 = arith.constant 21 : index
    %119 = memref.load %arg1[%c21] : memref<27xf32, #tpu.memory_space<smem>>
    %120 = vector.broadcast %119 : f32 to vector<8x128xf32>
    %121 = arith.mulf %120, %99 : vector<8x128xf32>
    %122 = arith.addf %118, %121 : vector<8x128xf32>
    %c23 = arith.constant 23 : index
    %123 = memref.load %arg1[%c23] : memref<27xf32, #tpu.memory_space<smem>>
    %124 = vector.broadcast %123 : f32 to vector<8x128xf32>
    %125 = arith.addf %122, %124 : vector<8x128xf32>
    %c12_42 = arith.constant 12 : index
    %c0_43 = arith.constant 0 : index
    %c0_44 = arith.constant 0 : index
    %126 = vector.load %arg3[%c12_42, %c0_43, %c0_44] : memref<17x8x128xf32, #tpu.memory_space<vmem>>, vector<1x8x128xf32>
    %127 = vector.shape_cast %126 : vector<1x8x128xf32> to vector<8x128xf32>
    %128 = vector.shape_cast %115 : vector<8x128xf32> to vector<1x8x128xf32>
    tpu.vector_store %arg3[%c12_42, %c0_43, %c0_44], %128 {strides = array<i32>} : memref<17x8x128xf32, #tpu.memory_space<vmem>>, vector<1x8x128xf32>,
    %c13_45 = arith.constant 13 : index
    %c0_46 = arith.constant 0 : index
    %c0_47 = arith.constant 0 : index
    %129 = vector.load %arg3[%c13_45, %c0_46, %c0_47] : memref<17x8x128xf32, #tpu.memory_space<vmem>>, vector<1x8x128xf32>
    %130 = vector.shape_cast %129 : vector<1x8x128xf32> to vector<8x128xf32>
    %131 = vector.shape_cast %125 : vector<8x128xf32> to vector<1x8x128xf32>
    tpu.vector_store %arg3[%c13_45, %c0_46, %c0_47], %131 {strides = array<i32>} : memref<17x8x128xf32, #tpu.memory_space<vmem>>, vector<1x8x128xf32>,
    %132 = math.tanh %115 : vector<8x128xf32>
    %133 = math.tanh %125 : vector<8x128xf32>
    %c14_48 = arith.constant 14 : index
    %c0_49 = arith.constant 0 : index
    %c0_50 = arith.constant 0 : index
    %134 = vector.load %arg3[%c14_48, %c0_49, %c0_50] : memref<17x8x128xf32, #tpu.memory_space<vmem>>, vector<1x8x128xf32>
    %135 = vector.shape_cast %134 : vector<1x8x128xf32> to vector<8x128xf32>
    %136 = vector.shape_cast %132 : vector<8x128xf32> to vector<1x8x128xf32>
    tpu.vector_store %arg3[%c14_48, %c0_49, %c0_50], %136 {strides = array<i32>} : memref<17x8x128xf32, #tpu.memory_space<vmem>>, vector<1x8x128xf32>,
    %c15_51 = arith.constant 15 : index
    %c0_52 = arith.constant 0 : index
    %c0_53 = arith.constant 0 : index
    %137 = vector.load %arg3[%c15_51, %c0_52, %c0_53] : memref<17x8x128xf32, #tpu.memory_space<vmem>>, vector<1x8x128xf32>
    %138 = vector.shape_cast %137 : vector<1x8x128xf32> to vector<8x128xf32>
    %139 = vector.shape_cast %133 : vector<8x128xf32> to vector<1x8x128xf32>
    tpu.vector_store %arg3[%c15_51, %c0_52, %c0_53], %139 {strides = array<i32>} : memref<17x8x128xf32, #tpu.memory_space<vmem>>, vector<1x8x128xf32>,
    %c24 = arith.constant 24 : index
    %140 = memref.load %arg1[%c24] : memref<27xf32, #tpu.memory_space<smem>>
    %141 = vector.broadcast %140 : f32 to vector<8x128xf32>
    %142 = arith.mulf %141, %132 : vector<8x128xf32>
    %c25 = arith.constant 25 : index
    %143 = memref.load %arg1[%c25] : memref<27xf32, #tpu.memory_space<smem>>
    %144 = vector.broadcast %143 : f32 to vector<8x128xf32>
    %145 = arith.mulf %144, %133 : vector<8x128xf32>
    %146 = arith.addf %142, %145 : vector<8x128xf32>
    %c26 = arith.constant 26 : index
    %147 = memref.load %arg1[%c26] : memref<27xf32, #tpu.memory_space<smem>>
    %148 = vector.broadcast %147 : f32 to vector<8x128xf32>
    %149 = arith.addf %146, %148 : vector<8x128xf32>
    %c16_54 = arith.constant 16 : index
    %c0_55 = arith.constant 0 : index
    %c0_56 = arith.constant 0 : index
    %150 = vector.load %arg3[%c16_54, %c0_55, %c0_56] : memref<17x8x128xf32, #tpu.memory_space<vmem>>, vector<1x8x128xf32>
    %151 = vector.shape_cast %150 : vector<1x8x128xf32> to vector<8x128xf32>
    %152 = vector.shape_cast %149 : vector<8x128xf32> to vector<1x8x128xf32>
    tpu.vector_store %arg3[%c16_54, %c0_55, %c0_56], %152 {strides = array<i32>} : memref<17x8x128xf32, #tpu.memory_space<vmem>>, vector<1x8x128xf32>,
    return
  }
  func.func @transform_0(%arg0: i32, %arg1: memref<27xf32, #tpu.memory_space<smem>>) -> (i32, i32, i32) {
    %c0_i32 = arith.constant 0 : i32
    %c0_i32_0 = arith.constant 0 : i32
    %c0_i32_1 = arith.constant 0 : i32
    return %c0_i32, %arg0, %c0_i32_0 : i32, i32, i32
  }
  func.func @transform_1(%arg0: i32, %arg1: memref<27xf32, #tpu.memory_space<smem>>) -> (i32, i32, i32) {
    %c0_i32 = arith.constant 0 : i32
    %c0_i32_0 = arith.constant 0 : i32
    %c0_i32_1 = arith.constant 0 : i32
    return %c0_i32, %arg0, %c0_i32_0 : i32, i32, i32
  }
}

</mosaic_0001>

<llo_original>
// kernel: tpu_custom_call.1
$region0: #{tpu_custom_call.1}
  #allocation0 [shape = 'u32[]', space=smem, size = 0x4, offset = 0x4, fixed_abs, tag = 'smem constant byte address 0x4 - core index']
  #allocation1 [shape = 'u32[72,128]{1,0:T(1,128)}', space=vmem, size = 0x9000, scoped, tag = 'internal scratch']
  #allocation2 [shape = 's32[1]{0}', space=sflag, size = 0x4, scoped, tag = 'scoped memory for tpu_custom_call.1']
  #allocation3 [shape = 'u8[512]{0}', space=smem, size = 0x200, scoped, tag = 'prefetched SMEM operand 0']
  %s0 = inlined_call_operand.hbm [shape: f32[27], index: 0, kind: input, shape index: {}]
  %s1 = inlined_call_operand.hbm [shape: f32[2,8,128], index: 1, kind: input, shape index: {}]
  %s2 = inlined_call_operand.hbm [shape: f32[17,8,128], index: 2, kind: output, shape index: {}]
  %s3 = sld [smem:[#allocation0]]
  $region18: #{tpu_custom_call.1} parent=0
    _
  %s5 = ssub.s32 1, %s3
  %s6 = scalar_select 0, %s5, %s3
  %s8 = sshll.u32 %s0, 4
  %s9 = int_to_ptr.hbm [resolvable:$true] %s8
  %11 = dma.hbm_to_smem %s9, 16, [#allocation3], [#allocation2]
  %13 = dma.done [#allocation2], 16
  %14 = sfence
  $region1: #{tpu_custom_call.1} parent=0
    #allocation4 [shape = 'u8[8192]{0}', space=vmem, size = 0x2000, scoped, tag = 'input window, operand 1, single buffered']
    #allocation5 [shape = 's32[1]{0}', space=sflag, size = 0x4, scoped, tag = 'scoped memory for tpu_custom_call.1']
    #allocation6 [shape = 's32[1]{0}', space=sflag, size = 0x4, scoped, tag = 'scoped memory for tpu_custom_call.1']
    #allocation7 [shape = 'u8[69632]{0}', space=vmem, size = 0x11000, scoped, tag = 'output window, operand 0, single buffered']
    %15 = vsyncpa [#allocation5], 0
    %16 = vsyncpa [#allocation6], 0
    // Predicated region
    $region2: #{tpu_custom_call.1} parent=1 // pred_check
      _
    $region3: #{tpu_custom_call.1} parent=1 // pred_check_branch
      %18 = sbr.rel (0) target = $region5
    $region4: #{tpu_custom_call.1} parent=1 // pred_region
      %20 = vsyncadd [#allocation5], 0
      %s21 = sshll.u32 %s1, 4
      %s22 = int_to_ptr.hbm [resolvable:$true] %s21
      %s23 = sshll.u32 [#allocation4], 4
      %s24 = int_to_ptr.vmem [resolvable:$true] %s23
      %29 = dma.hbm_to_vmem [thread:$0]  %s22, 256, %s24, [#allocation5], 128, 128, 8
    $region5: #{tpu_custom_call.1} parent=1 // pred_fallthru
      _
    // Predicated region
    $region6: #{tpu_custom_call.1} parent=1 // pred_check
      _
    $region7: #{tpu_custom_call.1} parent=1 // pred_check_branch
      %31 = sbr.rel (0) target = $region9
    $region8: #{tpu_custom_call.1} parent=1 // pred_region
      %33 = dma.done [#allocation5], 256
    $region9: #{tpu_custom_call.1} parent=1 // pred_fallthru
      _
    %v34 = vld [vmem:[#allocation4] sm:$0xff]
    %s35 = scalar_lea.vmem [#allocation4], 8
    %v36 = vld [vmem:[%s35] sm:$0xff]
    %s37 = sld [smem:[#allocation3]]
    %v38 = vstv %s37
    %v39 = vmul.f32 %v38, %v34
    %s40 = sld [smem:[#allocation3 + $0x1]]
    %v41 = vstv %s40
    %v42 = vmul.f32 %v41, %v36
    %v43 = vadd.f32 %v39, %v42
    %s44 = sld [smem:[#allocation3 + $0x4]]
    %v45 = vstv %s44
    %v46 = vadd.f32 %v43, %v45
    %s47 = sld [smem:[#allocation3 + $0x2]]
    %v48 = vstv %s47
    %v49 = vmul.f32 %v48, %v34
    %s50 = sld [smem:[#allocation3 + $0x3]]
    %v51 = vstv %s50
    %v52 = vmul.f32 %v51, %v36
    %v53 = vadd.f32 %v49, %v52
    %s54 = sld [smem:[#allocation3 + $0x5]]
    %v55 = vstv %s54
    %v56 = vadd.f32 %v53, %v55
    %57 = vst [vmem:[#allocation7] sm:$0xff] %v46
    %s58 = scalar_lea.vmem [#allocation7], 8
    %59 = vst [vmem:[%s58] sm:$0xff] %v56
    %v60 = vtanh.pop %v46
    %v61 = vtanh.pop %v56
    %s62 = scalar_lea.vmem [#allocation7], 16
    %63 = vst [vmem:[%s62] sm:$0xff] %v60
    %s64 = scalar_lea.vmem [#allocation7], 24
    %65 = vst [vmem:[%s64] sm:$0xff] %v61
    %s66 = sld [smem:[#allocation3 + $0x6]]
    %v67 = vstv %s66
    %v68 = vmul.f32 %v67, %v60
    %s69 = sld [smem:[#allocation3 + $0x7]]
    %v70 = vstv %s69
    %v71 = vmul.f32 %v70, %v61
    %v72 = vadd.f32 %v68, %v71
    %s73 = sld [smem:[#allocation3 + $0xa]]
    %v74 = vstv %s73
    %v75 = vadd.f32 %v72, %v74
    %s76 = sld [smem:[#allocation3 + $0x8]]
    %v77 = vstv %s76
    %v78 = vmul.f32 %v77, %v60
    %s79 = sld [smem:[#allocation3 + $0x9]]
    %v80 = vstv %s79
    %v81 = vmul.f32 %v80, %v61
    %v82 = vadd.f32 %v78, %v81
    %s83 = sld [smem:[#allocation3 + $0xb]]
    %v84 = vstv %s83
    %v85 = vadd.f32 %v82, %v84
    %s86 = scalar_lea.vmem [#allocation7], 32
    %87 = vst [vmem:[%s86] sm:$0xff] %v75
    %s88 = scalar_lea.vmem [#allocation7], 40
    %89 = vst [vmem:[%s88] sm:$0xff] %v85
    %v90 = vtanh.pop %v75
    %v91 = vtanh.pop %v85
    %s92 = scalar_lea.vmem [#allocation7], 48
    %93 = vst [vmem:[%s92] sm:$0xff] %v90
    %s94 = scalar_lea.vmem [#allocation7], 56
    %95 = vst [vmem:[%s94] sm:$0xff] %v91
    %s96 = sld [smem:[#allocation3 + $0xc]]
    %v97 = vstv %s96
    %v98 = vmul.f32 %v97, %v90
    %s99 = sld [smem:[#allocation3 + $0xd]]
    %v100 = vstv %s99
    %v101 = vmul.f32 %v100, %v91
    %v102 = vadd.f32 %v98, %v101
    %s103 = sld [smem:[#allocation3 + $0x10]]
    %v104 = vstv %s103
    %v105 = vadd.f32 %v102, %v104
    %s106 = sld [smem:[#allocation3 + $0xe]]
    %v107 = vstv %s106
    %v108 = vmul.f32 %v107, %v90
    %s109 = sld [smem:[#allocation3 + $0xf]]
    %v110 = vstv %s109
    %v111 = vmul.f32 %v110, %v91
    %v112 = vadd.f32 %v108, %v111
    %s113 = sld [smem:[#allocation3 + $0x11]]
    %v114 = vstv %s113
    %v115 = vadd.f32 %v112, %v114
    %s116 = scalar_lea.vmem [#allocation7], 64
    %117 = vst [vmem:[%s116] sm:$0xff] %v105
    %s118 = scalar_lea.vmem [#allocation7], 72
    %119 = vst [vmem:[%s118] sm:$0xff] %v115
    %v120 = vtanh.pop %v105
    %v121 = vtanh.pop %v115
    %s122 = scalar_lea.vmem [#allocation7], 80
    %123 = vst [vmem:[%s122] sm:$0xff] %v120
    %s124 = scalar_lea.vmem [#allocation7], 88
    %125 = vst [vmem:[%s124] sm:$0xff] %v121
    %s126 = sld [smem:[#allocation3 + $0x12]]
    %v127 = vstv %s126
    %v128 = vmul.f32 %v127, %v120
    %s129 = sld [smem:[#allocation3 + $0x13]]
    %v130 = vstv %s129
    %v131 = vmul.f32 %v130, %v121
    %v132 = vadd.f32 %v128, %v131
    %s133 = sld [smem:[#allocation3 + $0x16]]
    %v134 = vstv %s133
    %v135 = vadd.f32 %v132, %v134
    %s136 = sld [smem:[#allocation3 + $0x14]]
    %v137 = vstv %s136
    %v138 = vmul.f32 %v137, %v120
    %s139 = sld [smem:[#allocation3 + $0x15]]
    %v140 = vstv %s139
    %v141 = vmul.f32 %v140, %v121
    %v142 = vadd.f32 %v138, %v141
    %s143 = sld [smem:[#allocation3 + $0x17]]
    %v144 = vstv %s143
    %v145 = vadd.f32 %v142, %v144
    %s146 = scalar_lea.vmem [#allocation7], 96
    %147 = vst [vmem:[%s146] sm:$0xff] %v135
    %s148 = scalar_lea.vmem [#allocation7], 104
    %149 = vst [vmem:[%s148] sm:$0xff] %v145
    %v150 = vtanh.pop %v135
    %v151 = vtanh.pop %v145
    %s152 = scalar_lea.vmem [#allocation7], 112
    %153 = vst [vmem:[%s152] sm:$0xff] %v150
    %s154 = scalar_lea.vmem [#allocation7], 120
    %155 = vst [vmem:[%s154] sm:$0xff] %v151
    %s156 = sld [smem:[#allocation3 + $0x18]]
    %v157 = vstv %s156
    %v158 = vmul.f32 %v157, %v150
    %s159 = sld [smem:[#allocation3 + $0x19]]
    %v160 = vstv %s159
    %v161 = vmul.f32 %v160, %v151
    %v162 = vadd.f32 %v158, %v161
    %s163 = sld [smem:[#allocation3 + $0x1a]]
    %v164 = vstv %s163
    %v165 = vadd.f32 %v162, %v164
    %s166 = scalar_lea.vmem [#allocation7], 128
    %167 = vst [vmem:[%s166] sm:$0xff] %v165
    // Predicated region
    $region10: #{tpu_custom_call.1} parent=1 // pred_check
      _
    $region11: #{tpu_custom_call.1} parent=1 // pred_check_branch
      %169 = sbr.rel (0) target = $region13
    $region12: #{tpu_custom_call.1} parent=1 // pred_region
      %171 = vsyncadd [#allocation6], 0
      %s172 = sshll.u32 [#allocation7], 4
      %s173 = int_to_ptr.vmem [resolvable:$true] %s172
      %s174 = sshll.u32 %s2, 4
      %s175 = int_to_ptr.hbm [resolvable:$true] %s174
      %180 = dma.vmem_to_hbm [thread:$0]  %s173, 2176, %s175, [#allocation6], 128, 128, 8
    $region13: #{tpu_custom_call.1} parent=1 // pred_fallthru
      _
    // Predicated region
    $region14: #{tpu_custom_call.1} parent=1 // pred_check
      _
    $region15: #{tpu_custom_call.1} parent=1 // pred_check_branch
      %182 = sbr.rel (0) target = $region17
    $region16: #{tpu_custom_call.1} parent=1 // pred_region
      %184 = dma.done [#allocation6], 2176
    $region17: #{tpu_custom_call.1} parent=1 // pred_fallthru
      _
    %185 = vsyncpa [#allocation5], 1
    %186 = vsyncpa [#allocation6], 1

</llo_original>
